<compile_context>
chip_gen: v6e
topology: v6e:2x2x1
jax: 0.10.0
libtpu: 0.0.40
codegen_flags: <defaults>
</compile_context>

<pallas_src>
import jax
import jax.numpy as jnp
from jax.experimental import pallas as pl
from jax.experimental.pallas import tpu as pltpu

LANES = 128  # vreg lane width


def _bpr_loss_kernel(logit_ref, diag_ref, out_ref):
    j = pl.program_id(1)  # column (reduction) axis, last in the grid

    @pl.when(j == 0)
    def _init():
        out_ref[...] = jnp.zeros_like(out_ref)

    x = logit_ref[...].astype(jnp.float32)   # (TM, TN) tile, upcast per tile
    d = diag_ref[...].astype(jnp.float32)    # (TM, 1) positive logit per row

    diff = d - x                             # broadcast over columns
    # Numerically stable logsigmoid(diff) = min(diff, 0) - log1p(exp(-|diff|))
    logsig = jnp.minimum(diff, 0.0) - jnp.log1p(jnp.exp(-jnp.abs(diff)))

    tm, tn = logsig.shape
    if out_ref.shape[-1] == LANES and tn % LANES == 0:
        # Lane-dense accumulation: pairwise tree over static 128-wide slices.
        # Each slice picks whole vregs (no relayout); the adds are pure VALU.
        chunks = [logsig[:, c * LANES:(c + 1) * LANES] for c in range(tn // LANES)]
        while len(chunks) > 1:
            nxt = [chunks[a] + chunks[a + 1] for a in range(0, len(chunks) - 1, 2)]
            if len(chunks) % 2:
                nxt.append(chunks[-1])
            chunks = nxt
        out_ref[...] += chunks[0]
    else:
        # Small / awkward-B fallback (TN < 128 full-dim tile): cross-lane
        # (XLU) reduce straight into a (TM, 1) accumulator block.
        out_ref[...] += jnp.sum(logsig, axis=-1, keepdims=True)


def _pick_row_tile(B):
    # Cap at B//2 when possible so the "parallel" row axis has >= 2 steps
    # (keeps both v7x TensorCores busy); prefer an even number of row steps.
    cap = B if B < 16 else B // 2
    fallback = None
    for c in (512, 256, 128, 64, 32, 16, 8):
        if c <= cap and B % c == 0:
            if (B // c) % 2 == 0:
                return c
            if fallback is None:
                fallback = c
    return fallback if fallback is not None else B  # full dim as last resort


def _pick_col_tile(B, tm, itemsize):
    # Target ~8 MiB logit blocks (in HBM dtype): big enough to amortize the
    # ~0.35 us per-grid-step overhead, small enough to double-buffer in VMEM.
    max_block_bytes = 8 * 1024 * 1024
    for c in (8192, 4096, 2048, 1024, 512, 256, 128):
        if c <= B and B % c == 0 and tm * c * itemsize <= max_block_bytes:
            return c
    return B  # full dim fallback (small or non-divisible B)


def bpr_loss(logit, *, block_m=None, block_n=None):
    """logit: (B, B) array (f32 or bf16). Returns scalar f32 loss."""
    assert logit.ndim == 2 and logit.shape[0] == logit.shape[1], (
        "BPRLoss expects a square (B, B) logit matrix")
    B = logit.shape[0]
    itemsize = jnp.dtype(logit.dtype).itemsize

    tm = _pick_row_tile(B) if block_m is None else block_m
    tn = _pick_col_tile(B, tm, itemsize) if block_n is None else block_n
    assert B % tm == 0 and B % tn == 0, "tile sizes must divide B"
    assert tm == B or tm % 8 == 0, "row tile must be a multiple of 8 or the full dim"
    assert tn == B or tn % 128 == 0, "col tile must be a multiple of 128 or the full dim"

    # Lane-dense accumulator when column tiles are 128-aligned; otherwise the
    # tiny (B, 1) fallback (small B only).
    out_lanes = LANES if tn % LANES == 0 else 1

    # Positive-item logit per row as a tiny side input (kept in input dtype;
    # upcast happens per tile inside the kernel).
    diag = jnp.diagonal(logit).reshape(B, 1)

    grid = (B // tm, B // tn)

    # VMEM budget: double-buffered logit tile + resident output accumulator
    # + diag slab, with headroom; never below the 32 MiB scoped default.
    vmem_need = (2 * tm * tn * itemsize
                 + 2 * tm * out_lanes * 4
                 + 2 * tm * itemsize
                 + (1 << 20))
    vmem_limit = max(32 * 1024 * 1024, int(vmem_need * 5 // 4))

    partial = pl.pallas_call(
        _bpr_loss_kernel,
        out_shape=jax.ShapeDtypeStruct((B, out_lanes), jnp.float32),
        grid_spec=pltpu.PrefetchScalarGridSpec(
            num_scalar_prefetch=0,
            grid=grid,
            in_specs=[
                pl.BlockSpec((tm, tn), lambda i, j: (i, j)),   # logit tile
                pl.BlockSpec((tm, 1), lambda i, j: (i, 0)),    # diag row slab
            ],
            # Constant block index across j => output block is VMEM-resident
            # across the reduction axis and doubles as the accumulator.
            out_specs=pl.BlockSpec((tm, out_lanes), lambda i, j: (i, 0)),
        ),
        compiler_params=pltpu.CompilerParams(
            dimension_semantics=("parallel", "arbitrary"),
            vmem_limit_bytes=vmem_limit,
        ),
    )(logit, diag)

    # Tiny O(B*128) finalize in plain JAX: -mean over all B*B entries.
    return -(jnp.sum(partial) / jnp.float32(B * B))


def bpr_loss_ref(logit):
    """Pure-JAX reference mirroring the PyTorch forward."""
    x = logit.astype(jnp.float32)
    diag = jnp.diag(x).reshape(-1, 1)
    diff = diag - x
    logsig = jnp.minimum(diff, 0.0) - jnp.log1p(jnp.exp(-jnp.abs(diff)))
    return -jnp.mean(logsig)


if __name__ == "__main__":
    key = jax.random.PRNGKey(0)
    k0, k1, k2 = jax.random.split(key, 3)

    # Small shape matching the module's (B, B) contract (exercises the
    # full-dim fallback path, TN < 128).
    B = 8
    logit = jax.random.normal(k0, (B, B), dtype=jnp.float32)
    loss = bpr_loss(logit)
    jax.block_until_ready(loss)
    ref = bpr_loss_ref(logit)
    assert jnp.allclose(loss, ref, atol=1e-5, rtol=1e-5), (loss, ref)

    # Default tiling (lane-dense accumulator, >= 2 row steps for v7x cores)
    # and an explicit multi-step column-reduction grid.
    B2 = 256
    logit2 = jax.random.normal(k1, (B2, B2), dtype=jnp.float32)
    loss2a = bpr_loss(logit2)
    loss2b = bpr_loss(logit2, block_m=64, block_n=128)
    jax.block_until_ready((loss2a, loss2b))
    ref2 = bpr_loss_ref(logit2)
    assert jnp.allclose(loss2a, ref2, atol=1e-5, rtol=1e-5), (loss2a, ref2)
    assert jnp.allclose(loss2b, ref2, atol=1e-5, rtol=1e-5), (loss2b, ref2)

    # bf16 HBM-side input (wider column tiles), f32 accumulation in-kernel.
    logit3 = jax.random.normal(k2, (B2, B2), dtype=jnp.float32).astype(jnp.bfloat16)
    loss3 = bpr_loss(logit3)
    jax.block_until_ready(loss3)
    ref3 = bpr_loss_ref(logit3)
    assert jnp.allclose(loss3, ref3, atol=1e-4, rtol=1e-4), (loss3, ref3)

    print("KERNEL_OK")
</pallas_src>

<mosaic_0001>
module attributes {stable_mosaic.version = 11 : i64} {
  func.func @_bpr_loss_kernel(%arg0: i32, %arg1: i32, %arg2: memref<8x8xf32, #tpu.memory_space<vmem>>, %arg3: memref<8x1xf32, #tpu.memory_space<vmem>>, %arg4: memref<8x1xf32, #tpu.memory_space<vmem>>) attributes {dimension_semantics = [#tpu.dimension_semantics<parallel>, #tpu.dimension_semantics<arbitrary>], iteration_bounds = array<i64: 1, 1>, scalar_prefetch = 0 : i64, scratch_operands = 0 : i64, tpu.core_type = #tpu.core_type<tc>, window_params = [{transform_indices = @transform_0, window_bounds = array<i64: 8, 8>}, {transform_indices = @transform_1, window_bounds = array<i64: 8, 1>}, {transform_indices = @transform_2, window_bounds = array<i64: 8, 1>}]} {
    %c0_i32 = arith.constant 0 : i32
    %0 = arith.cmpi eq, %arg1, %c0_i32 : i32
    %1 = arith.extui %0 : i1 to i32
    %c0_i32_0 = arith.constant 0 : i32
    %2 = arith.cmpi ne, %1, %c0_i32_0 : i32
    scf.if %2 {
      %cst_10 = arith.constant 0.000000e+00 : f32
      %20 = vector.broadcast %cst_10 : f32 to vector<8x1xf32>
      %c0_11 = arith.constant 0 : index
      %c0_12 = arith.constant 0 : index
      %21 = vector.load %arg4[%c0_11, %c0_12] : memref<8x1xf32, #tpu.memory_space<vmem>>, vector<8x1xf32>
      tpu.vector_store %arg4[%c0_11, %c0_12], %20 {strides = array<i32>} : memref<8x1xf32, #tpu.memory_space<vmem>>, vector<8x1xf32>,
    } else {
    }
    %c0 = arith.constant 0 : index
    %c0_1 = arith.constant 0 : index
    %3 = vector.load %arg2[%c0, %c0_1] : memref<8x8xf32, #tpu.memory_space<vmem>>, vector<8x8xf32>
    %c0_2 = arith.constant 0 : index
    %c0_3 = arith.constant 0 : index
    %4 = vector.load %arg3[%c0_2, %c0_3] : memref<8x1xf32, #tpu.memory_space<vmem>>, vector<8x1xf32>
    %5 = vector.broadcast %4 : vector<8x1xf32> to vector<8x8xf32>
    %6 = arith.subf %5, %3 : vector<8x8xf32>
    %cst = arith.constant 0.000000e+00 : f32
    %7 = vector.broadcast %cst : f32 to vector<8x8xf32>
    %8 = arith.minimumf %6, %7 : vector<8x8xf32>
    %9 = math.absf %6 : vector<8x8xf32>
    %cst_4 = arith.constant 0.000000e+00 : f32
    %10 = vector.broadcast %cst_4 : f32 to vector<8x8xf32>
    %11 = arith.subf %10, %9 : vector<8x8xf32>
    %12 = math.exp %11 : vector<8x8xf32>
    %13 = math.log1p %12 : vector<8x8xf32>
    %14 = arith.subf %8, %13 : vector<8x8xf32>
    %c0_5 = arith.constant 0 : index
    %c0_6 = arith.constant 0 : index
    %15 = vector.load %arg4[%c0_5, %c0_6] : memref<8x1xf32, #tpu.memory_space<vmem>>, vector<8x1xf32>
    %cst_7 = arith.constant dense<0.000000e+00> : vector<8xf32>
    %16 = vector.multi_reduction <add>, %14, %cst_7 [1] : vector<8x8xf32> to vector<8xf32>
    %17 = vector.shape_cast %16 : vector<8xf32> to vector<8x1xf32>
    %18 = arith.addf %15, %17 : vector<8x1xf32>
    %c0_8 = arith.constant 0 : index
    %c0_9 = arith.constant 0 : index
    %19 = vector.load %arg4[%c0_8, %c0_9] : memref<8x1xf32, #tpu.memory_space<vmem>>, vector<8x1xf32>
    tpu.vector_store %arg4[%c0_8, %c0_9], %18 {strides = array<i32>} : memref<8x1xf32, #tpu.memory_space<vmem>>, vector<8x1xf32>,
    return
  }
  func.func @transform_0(%arg0: i32, %arg1: i32) -> (i32, i32) {
    %c0_i32 = arith.constant 0 : i32
    return %arg0, %arg1 : i32, i32
  }
  func.func @transform_1(%arg0: i32, %arg1: i32) -> (i32, i32) {
    %c0_i32 = arith.constant 0 : i32
    %c0_i32_0 = arith.constant 0 : i32
    return %arg0, %c0_i32 : i32, i32
  }
  func.func @transform_2(%arg0: i32, %arg1: i32) -> (i32, i32) {
    %c0_i32 = arith.constant 0 : i32
    %c0_i32_0 = arith.constant 0 : i32
    return %arg0, %c0_i32 : i32, i32
  }
}

</mosaic_0001>

<llo_original>
// kernel: tpu_custom_call.1
$region0: #{tpu_custom_call.1}
  #allocation0 [shape = 'u32[]', space=smem, size = 0x4, offset = 0x4, fixed_abs, tag = 'smem constant byte address 0x4 - core index']
  #allocation1 [shape = 'u32[144,128]{1,0:T(1,128)}', space=vmem, size = 0x12000, scoped, tag = 'internal scratch']
  %s0 = inlined_call_operand.vmem [shape: f32[8,8], index: 0, kind: input, shape index: {}]
  %s1 = inlined_call_operand.vmem [shape: f32[8,1], index: 1, kind: input, shape index: {}]
  %s2 = inlined_call_operand.vmem [shape: f32[8,1], index: 2, kind: output, shape index: {}]
  %s3 = sld [smem:[#allocation0]]
  $region22: #{tpu_custom_call.1} parent=0
    _
  %s5 = ssub.s32 1, %s3
  %s6 = scalar_select 0, %s5, %s3
  // Predicated region
  $region2: #{tpu_custom_call.1} parent=0 // pred_check
    _
  $region3: #{tpu_custom_call.1} parent=0 // pred_check_branch
    %8 = sbr.rel (0) target = $region5
  $region4: #{tpu_custom_call.1} parent=0 // pred_region
    _
  $region5: #{tpu_custom_call.1} parent=0 // pred_fallthru
    _
  // Predicated region
  $region6: #{tpu_custom_call.1} parent=0 // pred_check
    _
  $region7: #{tpu_custom_call.1} parent=0 // pred_check_branch
    %10 = sbr.rel (0) target = $region9
  $region8: #{tpu_custom_call.1} parent=0 // pred_region
    _
  $region9: #{tpu_custom_call.1} parent=0 // pred_fallthru
    _
  %p11 = scmp.eq.s32.totalorder 0, 0
  // Predicated region
  $region10: #{tpu_custom_call.1} parent=0 // pred_check
    %p12 = pneg %p11
  $region11: #{tpu_custom_call.1} parent=0 // pred_check_branch
    %14 = sbr.rel (%p12) target = $region13
  $region12: #{tpu_custom_call.1} parent=0 // pred_region
    %vm15 = vcmask 7168
    %16 = vst.msk [vmem:[%s2] sm:$0xff] %vm15, 0.0
  $region13: #{tpu_custom_call.1} parent=0 // pred_fallthru
    _
  %v17 = vld [vmem:[%s0] sm:$0xff]
  %v18 = vld [vmem:[%s1] sm:$0xff]
  %20 = vset.pattern.permute.xlu0 0
  %21 = vperm.xlu0 %20, %v18
  %v22 = vpop.permute.xlu0 %21
  %v24 = vsub.f32 %v22, %v17
  %v25 = vmin.f32 %v24, 0.0
  %v26 = vand.u32 2147483647, %v24
  %v27 = vsub.f32 0.0, %v26
  %v28 = vmul.f32 %v27, 1.442695
  %v29 = vpow.pop %v28
  %v30 = vadd.f32 %v29, 1.0
  %v31 = vlog2.pop %v30
  %v32 = vmul.f32 %v31, 0.6931472
  %v33 = vmul.f32 -0.5, %v29
  %v34 = vadd.f32 %v33, 1.0
  %v35 = vmul.f32 %v34, %v29
  %v36 = vand.u32 2147483647, %v29
  %vm37 = vcmp.lt.f32.partialorder %v36, 0.0004427343
  %v38 = vsel %vm37, %v35, %v32
  %v39 = vsub.f32 %v25, %v38
  %v40 = vld [vmem:[%s2] sm:$0xff]
  %vm41 = vcmask 64512
  %v42 = vsel %vm41, %v39, 0.0
  %43 = vadd.xlane.f32.xlu0 %v42
  %v44 = vpop.xlane.xlu0 %43
  %v45 = vadd.f32 %v40, %v44
  %vm46 = vcmask 7168
  %47 = vst.msk [vmem:[%s2] sm:$0xff] %vm46, %v45
  // Predicated region
  $region14: #{tpu_custom_call.1} parent=0 // pred_check
    _
  $region15: #{tpu_custom_call.1} parent=0 // pred_check_branch
    %49 = sbr.rel (0) target = $region17
  $region16: #{tpu_custom_call.1} parent=0 // pred_region
    _
  $region17: #{tpu_custom_call.1} parent=0 // pred_fallthru
    _
  // Predicated region
  $region18: #{tpu_custom_call.1} parent=0 // pred_check
    _
  $region19: #{tpu_custom_call.1} parent=0 // pred_check_branch
    %51 = sbr.rel (0) target = $region21
  $region20: #{tpu_custom_call.1} parent=0 // pred_region
    _
  $region21: #{tpu_custom_call.1} parent=0 // pred_fallthru
    _

</llo_original>
